<compile_context>
chip_gen: v5e
topology: v5e:2x2
jax: 0.10.0
libtpu: 0.0.40
codegen_flags: <defaults>
</compile_context>

<pallas_src>
import functools

import jax
import jax.numpy as jnp
from jax.experimental import pallas as pl
from jax.experimental.pallas import tpu as pltpu


def _round_up(x, m):
    return ((x + m - 1) // m) * m


def _mlp_kernel(dot_dtype, x_ref, *refs):
    """refs = (w0, b0, w1, b1, ..., wL, bL, out_ref).

    Computes the whole MLP for one batch tile. Weights/biases are small and
    VMEM-resident for every grid step.
    """
    out_ref = refs[-1]
    param_refs = refs[:-1]
    n_layers = len(param_refs) // 2

    h = x_ref[...]  # f32 tile, already in VMEM
    for i in range(n_layers):
        w = param_refs[2 * i][...]
        b = param_refs[2 * i + 1][...]
        if dot_dtype is not None:
            # MXU-native low-precision inputs, f32 accumulation. Elementwise
            # (bias add / ReLU) stays f32 (v5e has no bf16 VPU).
            lhs = h.astype(dot_dtype)
            rhs = w.astype(dot_dtype)
        else:
            lhs, rhs = h, w
        h = jnp.dot(lhs, rhs, preferred_element_type=jnp.float32) + b
        if i < n_layers - 1:  # ReLU after every layer except the last
            h = jnp.maximum(h, 0.0)
    out_ref[...] = h.astype(out_ref.dtype)


def dqn_forward(x, params, *, block_batch=2048, use_bf16_dot=False):
    """DQN MLP forward as one batch-gridded Pallas kernel.

    params: list of (W, b); W has shape (in, out), b has shape (1, out).
    """
    batch, state_dim = x.shape
    n_action = params[-1][0].shape[1]

    # Lane-dense output: pad the final layer's output width to a multiple of
    # 128 so the store is an unmasked 128-lane-dense vst; slice back after.
    out_pad = _round_up(n_action, 128)
    flat_params = []
    for li, (w, b) in enumerate(params):
        if li == len(params) - 1 and out_pad != n_action:
            w = jnp.pad(w, ((0, 0), (0, out_pad - n_action)))
            b = jnp.pad(b, ((0, 0), (0, out_pad - n_action)))
        flat_params.append(w)
        flat_params.append(b)

    # Batch tiling: large tiles amortize the ~0.35 us per-step overhead; the
    # tile must be a multiple of 8 (sublanes). Pad batch to a whole number of
    # tiles.
    tb = min(_round_up(block_batch, 8), _round_up(batch, 8))
    padded_batch = _round_up(batch, tb)
    if padded_batch != batch:
        x = jnp.pad(x, ((0, padded_batch - batch), (0, 0)))
    grid = (padded_batch // tb,)

    x_spec = pl.BlockSpec((tb, state_dim), lambda i: (i, 0))
    param_specs = [pl.BlockSpec(p.shape, lambda i: (0, 0)) for p in flat_params]
    out_spec = pl.BlockSpec((tb, out_pad), lambda i: (i, 0))

    # Scheduling hint for XLA around the custom call.
    flops = 2 * padded_batch * sum(w.shape[0] * w.shape[1] for w, _ in params)
    bytes_accessed = (
        x.size * x.dtype.itemsize
        + sum(p.size * p.dtype.itemsize for p in flat_params)
        + padded_batch * out_pad * 4
    )

    dot_dtype = jnp.bfloat16 if use_bf16_dot else None
    out_padded = pl.pallas_call(
        functools.partial(_mlp_kernel, dot_dtype),
        out_shape=jax.ShapeDtypeStruct((padded_batch, out_pad), jnp.float32),
        grid=grid,
        in_specs=[x_spec] + param_specs,
        out_specs=out_spec,
        compiler_params=pltpu.CompilerParams(
            dimension_semantics=("parallel",),
            vmem_limit_bytes=48 * 1024 * 1024,  # fits v7x's 64 MiB VMEM
        ),
        cost_estimate=pl.CostEstimate(
            flops=flops, transcendentals=0, bytes_accessed=bytes_accessed
        ),
    )(x, *flat_params)

    return out_padded[:batch, :n_action]


def init_dqn_params(key, state_dim, n_action, nb_neurons, depth):
    """Deterministic init matching the PyTorch module's layer shapes."""
    dims = [state_dim] + [nb_neurons] * (depth + 1) + [n_action]
    params = []
    for i in range(len(dims) - 1):
        fan_in, fan_out = dims[i], dims[i + 1]
        key, kw, kb = jax.random.split(key, 3)
        bound = 1.0 / jnp.sqrt(jnp.float32(fan_in))
        w = jax.random.uniform(kw, (fan_in, fan_out), jnp.float32, -bound, bound)
        b = jax.random.uniform(kb, (1, fan_out), jnp.float32, -bound, bound)
        params.append((w, b))
    return params


def dqn_reference(x, params):
    """Plain-JAX reference with the same math as the PyTorch module."""
    h = x
    for i, (w, b) in enumerate(params):
        h = h @ w + b
        if i < len(params) - 1:
            h = jnp.maximum(h, 0.0)
    return h


if __name__ == "__main__":
    state_dim = 16
    n_action = 4
    nb_neurons = 32
    depth = 2
    batch = 8

    key = jax.random.PRNGKey(0)
    key, kx = jax.random.split(key)
    x = jax.random.normal(kx, (batch, state_dim), dtype=jnp.float32)
    params = init_dqn_params(key, state_dim, n_action, nb_neurons, depth)

    # f32 path: exact semantics of the PyTorch module.
    out = dqn_forward(x, params)
    jax.block_until_ready(out)
    ref = dqn_reference(x, params)
    assert out.shape == (batch, n_action)
    assert jnp.allclose(out, ref, atol=1e-5, rtol=1e-5)

    # Multi-tile grid path (batch not a multiple of the tile): exercises the
    # batch padding + >1 grid steps with VMEM-resident weights.
    key, kx2 = jax.random.split(key)
    x2 = jax.random.normal(kx2, (300, state_dim), dtype=jnp.float32)
    out2 = dqn_forward(x2, params, block_batch=128)
    jax.block_until_ready(out2)
    ref2 = dqn_reference(x2, params)
    assert out2.shape == (300, n_action)
    assert jnp.allclose(out2, ref2, atol=1e-5, rtol=1e-5)

    # Optional bf16-MXU-inputs / f32-accumulate path (relaxed tolerance).
    out3 = dqn_forward(x2, params, block_batch=128, use_bf16_dot=True)
    jax.block_until_ready(out3)
    assert jnp.allclose(out3, ref2, atol=5e-2, rtol=5e-2)

    print("KERNEL_OK")
</pallas_src>

<mosaic_0001>
module attributes {stable_mosaic.version = 11 : i64} {
  func.func @_mlp_kernel(%arg0: i32, %arg1: memref<8x16xf32, #tpu.memory_space<vmem>>, %arg2: memref<16x32xf32, #tpu.memory_space<vmem>>, %arg3: memref<1x32xf32, #tpu.memory_space<vmem>>, %arg4: memref<32x32xf32, #tpu.memory_space<vmem>>, %arg5: memref<1x32xf32, #tpu.memory_space<vmem>>, %arg6: memref<32x32xf32, #tpu.memory_space<vmem>>, %arg7: memref<1x32xf32, #tpu.memory_space<vmem>>, %arg8: memref<32x128xf32, #tpu.memory_space<vmem>>, %arg9: memref<1x128xf32, #tpu.memory_space<vmem>>, %arg10: memref<8x128xf32, #tpu.memory_space<vmem>>) attributes {dimension_semantics = [#tpu.dimension_semantics<parallel>], iteration_bounds = array<i64: 1>, scalar_prefetch = 0 : i64, scratch_operands = 0 : i64, tpu.core_type = #tpu.core_type<tc>, window_params = [{transform_indices = @transform_0, window_bounds = array<i64: 8, 16>}, {pipeline_mode = #tpu.pipeline_mode<synchronous>, transform_indices = @transform_1, window_bounds = array<i64: 16, 32>}, {pipeline_mode = #tpu.pipeline_mode<synchronous>, transform_indices = @transform_2, window_bounds = array<i64: 1, 32>}, {pipeline_mode = #tpu.pipeline_mode<synchronous>, transform_indices = @transform_3, window_bounds = array<i64: 32, 32>}, {pipeline_mode = #tpu.pipeline_mode<synchronous>, transform_indices = @transform_4, window_bounds = array<i64: 1, 32>}, {pipeline_mode = #tpu.pipeline_mode<synchronous>, transform_indices = @transform_5, window_bounds = array<i64: 32, 32>}, {pipeline_mode = #tpu.pipeline_mode<synchronous>, transform_indices = @transform_6, window_bounds = array<i64: 1, 32>}, {pipeline_mode = #tpu.pipeline_mode<synchronous>, transform_indices = @transform_7, window_bounds = array<i64: 32, 128>}, {pipeline_mode = #tpu.pipeline_mode<synchronous>, transform_indices = @transform_8, window_bounds = array<i64: 1, 128>}, {transform_indices = @transform_9, window_bounds = array<i64: 8, 128>}]} {
    %c0 = arith.constant 0 : index
    %c0_0 = arith.constant 0 : index
    %0 = vector.load %arg1[%c0, %c0_0] : memref<8x16xf32, #tpu.memory_space<vmem>>, vector<8x16xf32>
    %c0_1 = arith.constant 0 : index
    %c0_2 = arith.constant 0 : index
    %1 = vector.load %arg2[%c0_1, %c0_2] : memref<16x32xf32, #tpu.memory_space<vmem>>, vector<16x32xf32>
    %c0_3 = arith.constant 0 : index
    %c0_4 = arith.constant 0 : index
    %2 = vector.load %arg3[%c0_3, %c0_4] : memref<1x32xf32, #tpu.memory_space<vmem>>, vector<1x32xf32>
    %cst = arith.constant dense<0.000000e+00> : vector<8x32xf32>
    %3 = tpu.matmul %0, %1, %cst {dimension_numbers = #tpu.dot_dimension_numbers<[1], [0], [0], [1], [0, 0, 1, 1], [], []>} : vector<8x16xf32>, vector<16x32xf32>, vector<8x32xf32> -> vector<8x32xf32>
    %4 = vector.broadcast %2 : vector<1x32xf32> to vector<8x32xf32>
    %5 = arith.addf %3, %4 : vector<8x32xf32>
    %cst_5 = arith.constant 0.000000e+00 : f32
    %6 = vector.broadcast %cst_5 : f32 to vector<8x32xf32>
    %7 = arith.maximumf %5, %6 : vector<8x32xf32>
    %c0_6 = arith.constant 0 : index
    %c0_7 = arith.constant 0 : index
    %8 = vector.load %arg4[%c0_6, %c0_7] : memref<32x32xf32, #tpu.memory_space<vmem>>, vector<32x32xf32>
    %c0_8 = arith.constant 0 : index
    %c0_9 = arith.constant 0 : index
    %9 = vector.load %arg5[%c0_8, %c0_9] : memref<1x32xf32, #tpu.memory_space<vmem>>, vector<1x32xf32>
    %cst_10 = arith.constant dense<0.000000e+00> : vector<8x32xf32>
    %10 = tpu.matmul %7, %8, %cst_10 {dimension_numbers = #tpu.dot_dimension_numbers<[1], [0], [0], [1], [0, 0, 1, 1], [], []>} : vector<8x32xf32>, vector<32x32xf32>, vector<8x32xf32> -> vector<8x32xf32>
    %11 = vector.broadcast %9 : vector<1x32xf32> to vector<8x32xf32>
    %12 = arith.addf %10, %11 : vector<8x32xf32>
    %cst_11 = arith.constant 0.000000e+00 : f32
    %13 = vector.broadcast %cst_11 : f32 to vector<8x32xf32>
    %14 = arith.maximumf %12, %13 : vector<8x32xf32>
    %c0_12 = arith.constant 0 : index
    %c0_13 = arith.constant 0 : index
    %15 = vector.load %arg6[%c0_12, %c0_13] : memref<32x32xf32, #tpu.memory_space<vmem>>, vector<32x32xf32>
    %c0_14 = arith.constant 0 : index
    %c0_15 = arith.constant 0 : index
    %16 = vector.load %arg7[%c0_14, %c0_15] : memref<1x32xf32, #tpu.memory_space<vmem>>, vector<1x32xf32>
    %cst_16 = arith.constant dense<0.000000e+00> : vector<8x32xf32>
    %17 = tpu.matmul %14, %15, %cst_16 {dimension_numbers = #tpu.dot_dimension_numbers<[1], [0], [0], [1], [0, 0, 1, 1], [], []>} : vector<8x32xf32>, vector<32x32xf32>, vector<8x32xf32> -> vector<8x32xf32>
    %18 = vector.broadcast %16 : vector<1x32xf32> to vector<8x32xf32>
    %19 = arith.addf %17, %18 : vector<8x32xf32>
    %cst_17 = arith.constant 0.000000e+00 : f32
    %20 = vector.broadcast %cst_17 : f32 to vector<8x32xf32>
    %21 = arith.maximumf %19, %20 : vector<8x32xf32>
    %c0_18 = arith.constant 0 : index
    %c0_19 = arith.constant 0 : index
    %22 = vector.load %arg8[%c0_18, %c0_19] : memref<32x128xf32, #tpu.memory_space<vmem>>, vector<32x128xf32>
    %c0_20 = arith.constant 0 : index
    %c0_21 = arith.constant 0 : index
    %23 = vector.load %arg9[%c0_20, %c0_21] : memref<1x128xf32, #tpu.memory_space<vmem>>, vector<1x128xf32>
    %cst_22 = arith.constant dense<0.000000e+00> : vector<8x128xf32>
    %24 = tpu.matmul %21, %22, %cst_22 {dimension_numbers = #tpu.dot_dimension_numbers<[1], [0], [0], [1], [0, 0, 1, 1], [], []>} : vector<8x32xf32>, vector<32x128xf32>, vector<8x128xf32> -> vector<8x128xf32>
    %25 = vector.broadcast %23 : vector<1x128xf32> to vector<8x128xf32>
    %26 = arith.addf %24, %25 : vector<8x128xf32>
    %c0_23 = arith.constant 0 : index
    %c0_24 = arith.constant 0 : index
    %27 = vector.load %arg10[%c0_23, %c0_24] : memref<8x128xf32, #tpu.memory_space<vmem>>, vector<8x128xf32>
    tpu.vector_store %arg10[%c0_23, %c0_24], %26 {strides = array<i32>} : memref<8x128xf32, #tpu.memory_space<vmem>>, vector<8x128xf32>,
    return
  }
  func.func @transform_0(%arg0: i32) -> (i32, i32) {
    %c0_i32 = arith.constant 0 : i32
    %c0_i32_0 = arith.constant 0 : i32
    return %arg0, %c0_i32 : i32, i32
  }
  func.func @transform_1(%arg0: i32) -> (i32, i32) {
    %c0_i32 = arith.constant 0 : i32
    %c0_i32_0 = arith.constant 0 : i32
    %c0_i32_1 = arith.constant 0 : i32
    return %c0_i32, %c0_i32_0 : i32, i32
  }
  func.func @transform_2(%arg0: i32) -> (i32, i32) {
    %c0_i32 = arith.constant 0 : i32
    %c0_i32_0 = arith.constant 0 : i32
    %c0_i32_1 = arith.constant 0 : i32
    return %c0_i32, %c0_i32_0 : i32, i32
  }
  func.func @transform_3(%arg0: i32) -> (i32, i32) {
    %c0_i32 = arith.constant 0 : i32
    %c0_i32_0 = arith.constant 0 : i32
    %c0_i32_1 = arith.constant 0 : i32
    return %c0_i32, %c0_i32_0 : i32, i32
  }
  func.func @transform_4(%arg0: i32) -> (i32, i32) {
    %c0_i32 = arith.constant 0 : i32
    %c0_i32_0 = arith.constant 0 : i32
    %c0_i32_1 = arith.constant 0 : i32
    return %c0_i32, %c0_i32_0 : i32, i32
  }
  func.func @transform_5(%arg0: i32) -> (i32, i32) {
    %c0_i32 = arith.constant 0 : i32
    %c0_i32_0 = arith.constant 0 : i32
    %c0_i32_1 = arith.constant 0 : i32
    return %c0_i32, %c0_i32_0 : i32, i32
  }
  func.func @transform_6(%arg0: i32) -> (i32, i32) {
    %c0_i32 = arith.constant 0 : i32
    %c0_i32_0 = arith.constant 0 : i32
    %c0_i32_1 = arith.constant 0 : i32
    return %c0_i32, %c0_i32_0 : i32, i32
  }
  func.func @transform_7(%arg0: i32) -> (i32, i32) {
    %c0_i32 = arith.constant 0 : i32
    %c0_i32_0 = arith.constant 0 : i32
    %c0_i32_1 = arith.constant 0 : i32
    return %c0_i32, %c0_i32_0 : i32, i32
  }
  func.func @transform_8(%arg0: i32) -> (i32, i32) {
    %c0_i32 = arith.constant 0 : i32
    %c0_i32_0 = arith.constant 0 : i32
    %c0_i32_1 = arith.constant 0 : i32
    return %c0_i32, %c0_i32_0 : i32, i32
  }
  func.func @transform_9(%arg0: i32) -> (i32, i32) {
    %c0_i32 = arith.constant 0 : i32
    %c0_i32_0 = arith.constant 0 : i32
    return %arg0, %c0_i32 : i32, i32
  }
}

</mosaic_0001>

<llo_original>
// kernel: tpu_custom_call.1
$region0: #{tpu_custom_call.1}
  #allocation0 [shape = 'u32[]', space=smem, size = 0x4, offset = 0x4, fixed_abs, tag = 'smem constant byte address 0x4 - core index']
  #allocation1 [shape = 'u32[72,128]{1,0:T(1,128)}', space=vmem, size = 0x9000, scoped, tag = 'internal scratch']
  %s0 = inlined_call_operand.hbm [shape: f32[8,16], index: 0, kind: input, shape index: {}]
  %s1 = inlined_call_operand.hbm [shape: f32[16,32], index: 1, kind: input, shape index: {}]
  %s2 = inlined_call_operand.vmem [shape: f32[1,32], index: 2, kind: input, shape index: {}]
  %s3 = inlined_call_operand.hbm [shape: f32[32,32], index: 3, kind: input, shape index: {}]
  %s4 = inlined_call_operand.vmem [shape: f32[1,32], index: 4, kind: input, shape index: {}]
  %s5 = inlined_call_operand.hbm [shape: f32[32,32], index: 5, kind: input, shape index: {}]
  %s6 = inlined_call_operand.vmem [shape: f32[1,32], index: 6, kind: input, shape index: {}]
  %s7 = inlined_call_operand.hbm [shape: f32[32,128], index: 7, kind: input, shape index: {}]
  %s8 = inlined_call_operand.vmem [shape: f32[1,128], index: 8, kind: input, shape index: {}]
  %s9 = inlined_call_operand.hbm [shape: f32[8,128], index: 9, kind: output, shape index: {}]
  %s10 = sld [smem:[#allocation0]]
  $region66: #{tpu_custom_call.1} parent=0
    _
  %s12 = ssub.s32 1, %s10
  %s13 = scalar_select 0, %s12, %s10
  $region1: #{tpu_custom_call.1} parent=0
    #allocation2 [shape = 'u8[4096]{0}', space=vmem, size = 0x1000, scoped, tag = 'input window, operand 0, single buffered']
    #allocation3 [shape = 's32[1]{0}', space=sflag, size = 0x4, scoped, tag = 'scoped memory for tpu_custom_call.1']
    #allocation4 [shape = 's32[1]{0}', space=sflag, size = 0x4, scoped, tag = 'scoped memory for tpu_custom_call.1']
    #allocation5 [shape = 'u8[8192]{0}', space=vmem, size = 0x2000, scoped, tag = 'input window, operand 1, single buffered']
    #allocation6 [shape = 's32[1]{0}', space=sflag, size = 0x4, scoped, tag = 'scoped memory for tpu_custom_call.1']
    #allocation7 [shape = 'u8[16384]{0}', space=vmem, size = 0x4000, scoped, tag = 'input window, operand 3, single buffered']
    #allocation8 [shape = 'u8[16384]{0}', space=vmem, size = 0x4000, scoped, tag = 'input window, operand 5, single buffered']
    #allocation9 [shape = 's32[1]{0}', space=sflag, size = 0x4, scoped, tag = 'scoped memory for tpu_custom_call.1']
    #allocation10 [shape = 'u8[16384]{0}', space=vmem, size = 0x4000, scoped, tag = 'input window, operand 7, single buffered']
    #allocation11 [shape = 'u8[4096]{0}', space=vmem, size = 0x1000, scoped, tag = 'output window, operand 0, single buffered']
    %14 = vsyncpa [#allocation3], 0
    %15 = vsyncpa [#allocation6], 0
    %16 = vsyncpa [#allocation9], 0
    %17 = vsyncpa [#allocation4], 0
    // Predicated region
    $region2: #{tpu_custom_call.1} parent=1 // pred_check
      _
    $region3: #{tpu_custom_call.1} parent=1 // pred_check_branch
      %19 = sbr.rel (0) target = $region5
    $region4: #{tpu_custom_call.1} parent=1 // pred_region
      %21 = vsyncadd [#allocation3], 0
      %s23 = sshll.u32 %s0, 4
      %s24 = int_to_ptr.hbm [resolvable:$true] %s23
      %s25 = sshll.u32 [#allocation2], 4
      %s26 = int_to_ptr.vmem [resolvable:$true] %s25
      %28 = dma.hbm_to_vmem [thread:$0]  %s24, 128, %s26, [#allocation3]
    $region5: #{tpu_custom_call.1} parent=1 // pred_fallthru
      _
    // Predicated region
    $region6: #{tpu_custom_call.1} parent=1 // pred_check
      _
    $region7: #{tpu_custom_call.1} parent=1 // pred_check_branch
      %30 = sbr.rel (0) target = $region9
    $region8: #{tpu_custom_call.1} parent=1 // pred_region
      %32 = vsyncadd [#allocation6], 0
      %s33 = sshll.u32 %s1, 4
      %s34 = int_to_ptr.hbm [resolvable:$true] %s33
      %s35 = sshll.u32 [#allocation5], 4
      %s36 = int_to_ptr.vmem [resolvable:$true] %s35
      %41 = dma.hbm_to_vmem [thread:$0]  %s34, 256, %s36, [#allocation6], 128, 128, 8
    $region9: #{tpu_custom_call.1} parent=1 // pred_fallthru
      _
    // Predicated region
    $region10: #{tpu_custom_call.1} parent=1 // pred_check
      _
    $region11: #{tpu_custom_call.1} parent=1 // pred_check_branch
      %43 = sbr.rel (0) target = $region13
    $region12: #{tpu_custom_call.1} parent=1 // pred_region
      _
    $region13: #{tpu_custom_call.1} parent=1 // pred_fallthru
      _
    // Predicated region
    $region14: #{tpu_custom_call.1} parent=1 // pred_check
      _
    $region15: #{tpu_custom_call.1} parent=1 // pred_check_branch
      %45 = sbr.rel (0) target = $region17
    $region16: #{tpu_custom_call.1} parent=1 // pred_region
      %47 = vsyncadd [#allocation6], 0
      %s48 = sshll.u32 %s3, 4
      %s49 = int_to_ptr.hbm [resolvable:$true] %s48
      %s50 = sshll.u32 [#allocation7], 4
      %s51 = int_to_ptr.vmem [resolvable:$true] %s50
      %56 = dma.hbm_to_vmem [thread:$0]  %s49, 512, %s51, [#allocation6], 128, 128, 8
    $region17: #{tpu_custom_call.1} parent=1 // pred_fallthru
      _
    // Predicated region
    $region18: #{tpu_custom_call.1} parent=1 // pred_check
      _
    $region19: #{tpu_custom_call.1} parent=1 // pred_check_branch
      %58 = sbr.rel (0) target = $region21
    $region20: #{tpu_custom_call.1} parent=1 // pred_region
      _
    $region21: #{tpu_custom_call.1} parent=1 // pred_fallthru
      _
    // Predicated region
    $region22: #{tpu_custom_call.1} parent=1 // pred_check
      _
    $region23: #{tpu_custom_call.1} parent=1 // pred_check_branch
      %60 = sbr.rel (0) target = $region25
    $region24: #{tpu_custom_call.1} parent=1 // pred_region
      %62 = vsyncadd [#allocation9], 0
      %s63 = sshll.u32 %s5, 4
      %s64 = int_to_ptr.hbm [resolvable:$true] %s63
      %s65 = sshll.u32 [#allocation8], 4
      %s66 = int_to_ptr.vmem [resolvable:$true] %s65
      %71 = dma.hbm_to_vmem [thread:$0]  %s64, 512, %s66, [#allocation9], 128, 128, 8
    $region25: #{tpu_custom_call.1} parent=1 // pred_fallthru
      _
    // Predicated region
    $region26: #{tpu_custom_call.1} parent=1 // pred_check
      _
    $region27: #{tpu_custom_call.1} parent=1 // pred_check_branch
      %73 = sbr.rel (0) target = $region29
    $region28: #{tpu_custom_call.1} parent=1 // pred_region
      _
    $region29: #{tpu_custom_call.1} parent=1 // pred_fallthru
      _
    // Predicated region
    $region30: #{tpu_custom_call.1} parent=1 // pred_check
      _
    $region31: #{tpu_custom_call.1} parent=1 // pred_check_branch
      %75 = sbr.rel (0) target = $region33
    $region32: #{tpu_custom_call.1} parent=1 // pred_region
      %77 = vsyncadd [#allocation9], 0
      %s78 = sshll.u32 %s7, 4
      %s79 = int_to_ptr.hbm [resolvable:$true] %s78
      %s80 = sshll.u32 [#allocation10], 4
      %s81 = int_to_ptr.vmem [resolvable:$true] %s80
      %86 = dma.hbm_to_vmem [thread:$0]  %s79, 512, %s81, [#allocation9], 128, 128, 8
    $region33: #{tpu_custom_call.1} parent=1 // pred_fallthru
      _
    // Predicated region
    $region34: #{tpu_custom_call.1} parent=1 // pred_check
      _
    $region35: #{tpu_custom_call.1} parent=1 // pred_check_branch
      %88 = sbr.rel (0) target = $region37
    $region36: #{tpu_custom_call.1} parent=1 // pred_region
      _
    $region37: #{tpu_custom_call.1} parent=1 // pred_fallthru
      _
    // Predicated region
    $region38: #{tpu_custom_call.1} parent=1 // pred_check
      _
    $region39: #{tpu_custom_call.1} parent=1 // pred_check_branch
      %90 = sbr.rel (0) target = $region41
    $region40: #{tpu_custom_call.1} parent=1 // pred_region
      %92 = dma.done [#allocation3], 128
    $region41: #{tpu_custom_call.1} parent=1 // pred_fallthru
      _
    // Predicated region
    $region42: #{tpu_custom_call.1} parent=1 // pred_check
      _
    $region43: #{tpu_custom_call.1} parent=1 // pred_check_branch
      %94 = sbr.rel (0) target = $region45
    $region44: #{tpu_custom_call.1} parent=1 // pred_region
      %96 = dma.done [#allocation6], 256
    $region45: #{tpu_custom_call.1} parent=1 // pred_fallthru
      _
    // Predicated region
    $region46: #{tpu_custom_call.1} parent=1 // pred_check
      _
    $region47: #{tpu_custom_call.1} parent=1 // pred_check_branch
      %98 = sbr.rel (0) target = $region49
    $region48: #{tpu_custom_call.1} parent=1 // pred_region
      %100 = dma.done [#allocation6], 512
    $region49: #{tpu_custom_call.1} parent=1 // pred_fallthru
      _
    // Predicated region
    $region50: #{tpu_custom_call.1} parent=1 // pred_check
      _
    $region51: #{tpu_custom_call.1} parent=1 // pred_check_branch
      %102 = sbr.rel (0) target = $region53
    $region52: #{tpu_custom_call.1} parent=1 // pred_region
      %104 = dma.done [#allocation9], 512
    $region53: #{tpu_custom_call.1} parent=1 // pred_fallthru
      _
    // Predicated region
    $region54: #{tpu_custom_call.1} parent=1 // pred_check
      _
    $region55: #{tpu_custom_call.1} parent=1 // pred_check_branch
      %106 = sbr.rel (0) target = $region57
    $region56: #{tpu_custom_call.1} parent=1 // pred_region
      %108 = dma.done [#allocation9], 512
    $region57: #{tpu_custom_call.1} parent=1 // pred_fallthru
      _
    %v109 = vld [vmem:[#allocation2] sm:$0xff]
    %v110 = vld [vmem:[#allocation5] sm:$0xff]
    %v111 = vld [vmem:[#allocation5 + $0x8] sm:$0xff]
    %v112 = vld [vmem:[%s2] sm:$0x1]
    %v114 = vperm.slane %v112, 0
    %vm116 = vcmask 130048
    %v118 = vsel %vm116, %v109, 0
    %120 = vmatpush.msra.mxu0 0.0
    %121 = vmatpush.msra.mxu0 0.0
    %122 = vmatpush.msra.mxu0 0.0
    %123 = vmatpush.msra.mxu0 0.0
    %124 = vmatpush.msra.mxu0 0.0
    %125 = vmatpush.msra.mxu0 0.0
    %126 = vmatpush.msra.mxu0 0.0
    %127 = vmatpush.msra.mxu0 0.0
    %128 = vmatpush.msra.mxu0 0.0
    %129 = vmatpush.msra.mxu0 0.0
    %130 = vmatpush.msra.mxu0 0.0
    %131 = vmatpush.msra.mxu0 0.0
    %132 = vmatpush.msra.mxu0 0.0
    %133 = vmatpush.msra.mxu0 0.0
    %134 = vmatpush.msra.mxu0 %v111
    %135 = vmatpush.msra.mxu0 %v110
    %136 = vmatmul.f32.gmra.mxu0 %v118
    %v137 = vpop.f32.mrf.mxu0
    %v138 = vadd.f32 %v114, %v137
    %139 = vdwg.mxu0
    %v140 = vmax.f32 %v138, 0.0
    %v141 = vld [vmem:[#allocation7] sm:$0xff]
    %v142 = vld [vmem:[#allocation7 + $0x8] sm:$0xff]
    %v143 = vld [vmem:[#allocation7 + $0x10] sm:$0xff]
    %v144 = vld [vmem:[#allocation7 + $0x18] sm:$0xff]
    %v145 = vld [vmem:[%s4] sm:$0x1]
    %v147 = vperm.slane %v145, 0
    %vm149 = vcmask 261120
    %v151 = vsel %vm149, %v140, 0
    %153 = vmatpush.msra.mxu0 0.0
    %154 = vmatpush.msra.mxu0 0.0
    %155 = vmatpush.msra.mxu0 0.0
    %156 = vmatpush.msra.mxu0 0.0
    %157 = vmatpush.msra.mxu0 0.0
    %158 = vmatpush.msra.mxu0 0.0
    %159 = vmatpush.msra.mxu0 0.0
    %160 = vmatpush.msra.mxu0 0.0
    %161 = vmatpush.msra.mxu0 0.0
    %162 = vmatpush.msra.mxu0 0.0
    %163 = vmatpush.msra.mxu0 0.0
    %164 = vmatpush.msra.mxu0 0.0
    %165 = vmatpush.msra.mxu0 %v144
    %166 = vmatpush.msra.mxu0 %v143
    %167 = vmatpush.msra.mxu0 %v142
    %168 = vmatpush.msra.mxu0 %v141
    %169 = vmatmul.f32.gmra.mxu0 %v151
    %v170 = vpop.f32.mrf.mxu0
    %v171 = vadd.f32 %v147, %v170
    %172 = vdwg.mxu0
    %v173 = vmax.f32 %v171, 0.0
    %v174 = vld [vmem:[#allocation8] sm:$0xff]
    %v175 = vld [vmem:[#allocation8 + $0x8] sm:$0xff]
    %v176 = vld [vmem:[#allocation8 + $0x10] sm:$0xff]
    %v177 = vld [vmem:[#allocation8 + $0x18] sm:$0xff]
    %v178 = vld [vmem:[%s6] sm:$0x1]
    %v180 = vperm.slane %v178, 0
    %v183 = vsel %vm149, %v173, 0
    %185 = vmatpush.msra.mxu0 0.0
    %186 = vmatpush.msra.mxu0 0.0
    %187 = vmatpush.msra.mxu0 0.0
    %188 = vmatpush.msra.mxu0 0.0
    %189 = vmatpush.msra.mxu0 0.0
    %190 = vmatpush.msra.mxu0 0.0
    %191 = vmatpush.msra.mxu0 0.0
    %192 = vmatpush.msra.mxu0 0.0
    %193 = vmatpush.msra.mxu0 0.0
    %194 = vmatpush.msra.mxu0 0.0
    %195 = vmatpush.msra.mxu0 0.0
    %196 = vmatpush.msra.mxu0 0.0
    %197 = vmatpush.msra.mxu0 %v177
    %198 = vmatpush.msra.mxu0 %v176
    %199 = vmatpush.msra.mxu0 %v175
    %200 = vmatpush.msra.mxu0 %v174
    %201 = vmatmul.f32.gmra.mxu0 %v183
    %v202 = vpop.f32.mrf.mxu0
    %v203 = vadd.f32 %v180, %v202
    %204 = vdwg.mxu0
    %v205 = vmax.f32 %v203, 0.0
    %v206 = vld [vmem:[#allocation10] sm:$0xff]
    %v207 = vld [vmem:[#allocation10 + $0x8] sm:$0xff]
    %v208 = vld [vmem:[#allocation10 + $0x10] sm:$0xff]
    %v209 = vld [vmem:[#allocation10 + $0x18] sm:$0xff]
    %v210 = vld [vmem:[%s8] sm:$0x1]
    %v212 = vperm.slane %v210, 0
    %v215 = vsel %vm149, %v205, 0
    %217 = vmatpush.msra.mxu0 0.0
    %218 = vmatpush.msra.mxu0 0.0
    %219 = vmatpush.msra.mxu0 0.0
    %220 = vmatpush.msra.mxu0 0.0
    %221 = vmatpush.msra.mxu0 0.0
    %222 = vmatpush.msra.mxu0 0.0
    %223 = vmatpush.msra.mxu0 0.0
    %224 = vmatpush.msra.mxu0 0.0
    %225 = vmatpush.msra.mxu0 0.0
    %226 = vmatpush.msra.mxu0 0.0
    %227 = vmatpush.msra.mxu0 0.0
    %228 = vmatpush.msra.mxu0 0.0
    %229 = vmatpush.msra.mxu0 %v209
    %230 = vmatpush.msra.mxu0 %v208
    %231 = vmatpush.msra.mxu0 %v207
    %232 = vmatpush.msra.mxu0 %v206
    %233 = vmatmul.f32.gmra.mxu0 %v215
    %v234 = vpop.f32.mrf.mxu0
    %v235 = vadd.f32 %v212, %v234
    %236 = vdwg.mxu0
    %237 = vst [vmem:[#allocation11] sm:$0xff] %v235
    // Predicated region
    $region58: #{tpu_custom_call.1} parent=1 // pred_check
      _
    $region59: #{tpu_custom_call.1} parent=1 // pred_check_branch
      %239 = sbr.rel (0) target = $region61
    $region60: #{tpu_custom_call.1} parent=1 // pred_region
      %241 = vsyncadd [#allocation4], 0
      %s243 = sshll.u32 [#allocation11], 4
      %s244 = int_to_ptr.vmem [resolvable:$true] %s243
      %s245 = sshll.u32 %s9, 4
      %s246 = int_to_ptr.hbm [resolvable:$true] %s245
      %248 = dma.vmem_to_hbm [thread:$0]  %s244, 128, %s246, [#allocation4]
    $region61: #{tpu_custom_call.1} parent=1 // pred_fallthru
      _
    // Predicated region
    $region62: #{tpu_custom_call.1} parent=1 // pred_check
      _
    $region63: #{tpu_custom_call.1} parent=1 // pred_check_branch
      %250 = sbr.rel (0) target = $region65
    $region64: #{tpu_custom_call.1} parent=1 // pred_region
      %252 = dma.done [#allocation4], 128
    $region65: #{tpu_custom_call.1} parent=1 // pred_fallthru
      _
    %253 = vsyncpa [#allocation3], 1
    %254 = vsyncpa [#allocation6], 1
    %255 = vsyncpa [#allocation9], 1
    %256 = vsyncpa [#allocation4], 1

</llo_original>
